<compile_context>
chip_gen: v5e
topology: v5e:2x2
jax: 0.10.0
libtpu: 0.0.40
codegen_flags: <defaults>
</compile_context>

<pallas_src>
import functools

import jax
import jax.numpy as jnp
from jax import lax
from jax.experimental import pallas as pl
from jax.experimental.pallas import tpu as pltpu

_LANES = 128
_DEFAULT_MIN_PALLAS_JOINTS = 32768       # below this, fused XLA beats kernel launch
_DEFAULT_BLOCK_BYTES = 2 * 1024 * 1024   # physical VMEM bytes per input block


def _round_up(x, m):
    return (x + m - 1) // m * m


# ----------------------------- in-kernel helpers -----------------------------


def _center_lane_mask(width, width_p):
    """(1, width_p) bool mask of 'joint center' lanes (lane % 3 == 1, lane < width).

    Built with float ops only (the VPU has no vector integer div/mod)."""
    lane = lax.broadcasted_iota(jnp.int32, (1, width_p), 1)
    lane_f = lane.astype(jnp.float32)
    snapped = jnp.floor((lane_f - 1.0) * (1.0 / 3.0) + 0.5) * 3.0 + 1.0
    return jnp.logical_and(snapped == lane_f, lane < width)


def _grouped_sq_dist(p_ref, l_ref, buf_ref, r0, nrows, width, width_p):
    """Per-joint squared 3D distance slab for rows [r0, r0+nrows) of the block.

    Returns (nrows, width_p) f32 whose 'center' lanes (3*j + 1, j < width//3)
    hold dx^2+dy^2+dz^2 of joint j; other lanes are junk.  The interleaved
    data is staged through a 128-lane-aligned VMEM scratch so both rolls
    operate on an aligned slab (reliable lowering, XLU slots only).
    """
    p = p_ref[pl.ds(r0, nrows), :].astype(jnp.float32)
    l = l_ref[pl.ds(r0, nrows), :].astype(jnp.float32)
    d = p - l
    d2 = d * d
    if width != width_p:
        buf_ref[:nrows, :width] = d2
        d2 = buf_ref[:nrows, :]
    # neighbours at +-1 lane (shift set {1, width_p-1} is sign-convention safe)
    return d2 + pltpu.roll(d2, 1, axis=1) + pltpu.roll(d2, width_p - 1, axis=1)


def _fold_rows_to8(x, nrows, width_p):
    """Fold (nrows, width_p) -> (8, width_p) with vreg-aligned VPU adds."""
    if nrows == 8:
        return x
    if nrows % 8 == 0:
        return jnp.sum(x.reshape(nrows // 8, 8, width_p), axis=0)
    # odd row count (single-block small-batch case): full reduce into sublane 0
    s = jnp.sum(x, axis=0, keepdims=True)
    rid = lax.broadcasted_iota(jnp.int32, (8, width_p), 0)
    return jnp.where(rid == 0, s, 0.0)


# --------------------------------- kernels -----------------------------------


def _mpjpe_sum_kernel(p_ref, l_ref, acc_ref, buf_ref, *,
                      rows, width, width_p, chunk, inner, batch, mask_rows):
    """Sum/mean path: resident (8, width_p) accumulator per 'outer' block."""
    i = pl.program_id(1)

    @pl.when(i == 0)
    def _init():
        acc_ref[...] = jnp.zeros_like(acc_ref)

    block_idx = pl.program_id(0) * inner + i
    row0_global = block_idx * rows
    center = _center_lane_mask(width, width_p)           # loop-invariant

    def partial_sum(r0, nrows):
        s = _grouped_sq_dist(p_ref, l_ref, buf_ref, r0, nrows, width, width_p)
        m = center
        if mask_rows:  # final row-block may extend past the batch
            rid = lax.broadcasted_iota(jnp.int32, (nrows, 1), 0)
            m = jnp.logical_and(m, rid + (row0_global + r0) < batch)
        dist = jnp.sqrt(jnp.where(m, s, 0.0))             # masked lanes/rows -> 0
        return _fold_rows_to8(dist, nrows, width_p)

    n_full = rows // chunk
    tail = rows - n_full * chunk

    acc = jnp.zeros((8, width_p), jnp.float32)
    if 0 < n_full <= 8:
        for c in range(n_full):
            acc = acc + partial_sum(c * chunk, chunk)
    elif n_full > 8:
        def body(c, a):
            return a + partial_sum(pl.multiple_of(c * chunk, chunk), chunk)
        acc = lax.fori_loop(0, n_full, body, acc, unroll=4)
    if tail:
        acc = acc + partial_sum(n_full * chunk, tail)

    acc_ref[...] += acc


def _mpjpe_none_kernel(p_ref, l_ref, o_ref, buf_ref, *, rows, width, width_p, chunk):
    """reduction='none' path: lane-dense (rows, width_p) distance slab out."""
    def emit(r0, nrows):
        s = _grouped_sq_dist(p_ref, l_ref, buf_ref, r0, nrows, width, width_p)
        o_ref[pl.ds(r0, nrows), :] = jnp.sqrt(jnp.maximum(s, 0.0))

    n_full = rows // chunk
    tail = rows - n_full * chunk
    if 0 < n_full <= 8:
        for c in range(n_full):
            emit(c * chunk, chunk)
    elif n_full > 8:
        def body(c, carry):
            emit(pl.multiple_of(c * chunk, chunk), chunk)
            return carry
        lax.fori_loop(0, n_full, body, 0, unroll=4)
    if tail:
        emit(n_full * chunk, tail)


# --------------------------------- wrapper ------------------------------------


def _plan(batch, width_p, target_block_bytes):
    """Choose (rows_per_block, outer, inner, chunk_rows)."""
    # chunk: ~8K padded f32 elements of live compute -> no vreg spills
    chunk = max(8, min(256, (8192 // width_p) // 8 * 8))
    row_bytes = width_p * 4                               # physical bytes per row
    cap = max(chunk, (target_block_bytes // row_bytes) // chunk * chunk)
    if batch <= cap:
        return batch, 1, 1, chunk                         # one block, all rows
    rows = cap
    nblocks = pl.cdiv(batch, rows)
    if nblocks % 2:
        # best effort: even block count so the "parallel" outer axis splits
        # across v7x's two TensorCores (harmless on v5e/v6e)
        alt = _round_up(pl.cdiv(batch, nblocks + 1), chunk)
        if alt >= chunk and pl.cdiv(batch, alt) % 2 == 0:
            rows = alt
            nblocks = pl.cdiv(batch, rows)
    if nblocks % 2 == 0:
        return rows, 2, nblocks // 2, chunk
    return rows, 1, nblocks, chunk


def _mpjpe_jax(pred, label, weight, reduction):
    """Pure-JAX reference / small-problem fast path (mirrors the torch forward)."""
    batch = pred.shape[0]
    p = pred.reshape(batch, -1).astype(jnp.float32)
    l = label.reshape(batch, -1).astype(jnp.float32)
    d = p - l
    dist = jnp.sqrt(jnp.sum((d * d).reshape(batch, -1, 3), axis=2))
    if reduction == "sum":
        out = weight * jnp.sum(dist)
    elif reduction == "none":
        out = weight * dist
    else:
        out = weight * jnp.mean(dist)
    return out.astype(pred.dtype)


def mpjpe_criterion(pred, label, weight=1.0, reduction="elementwise_mean", *,
                    min_pallas_joints=_DEFAULT_MIN_PALLAS_JOINTS,
                    target_block_bytes=_DEFAULT_BLOCK_BYTES):
    """Pallas TPU implementation of MPJPECriterion.forward."""
    batch = pred.shape[0]
    p2 = pred.reshape(batch, -1)
    l2 = label.reshape(batch, -1)
    width = p2.shape[1]
    if width % 3 != 0:
        raise ValueError("interleaved (x,y,z) joints require D % 3 == 0")
    joints = width // 3
    n_joints = batch * joints
    out_dtype = p2.dtype

    if n_joints < min_pallas_joints or batch < 1:
        # kernel launch + grid-step overhead loses to a single fused XLA op here
        return _mpjpe_jax(pred, label, weight, reduction)

    width_p = _round_up(width, _LANES)
    rows, outer, inner, chunk = _plan(batch, width_p, target_block_bytes)
    nblocks = outer * inner
    mask_rows = nblocks * rows != batch
    scratch = pltpu.VMEM((min(chunk, rows), width_p), jnp.float32)
    # Note: if a v7x trace ever shows exposed input DMA, add
    # pipeline_mode=pl.Buffered(3) to the two input BlockSpecs below.

    if reduction == "none":
        kernel = functools.partial(
            _mpjpe_none_kernel, rows=rows, width=width, width_p=width_p, chunk=chunk)
        slab = pl.pallas_call(
            kernel,
            out_shape=jax.ShapeDtypeStruct((batch, width_p), jnp.float32),
            grid=(nblocks,),
            in_specs=[pl.BlockSpec((rows, width), lambda b: (b, 0)),
                      pl.BlockSpec((rows, width), lambda b: (b, 0))],
            out_specs=pl.BlockSpec((rows, width_p), lambda b: (b, 0)),
            scratch_shapes=[scratch],
            compiler_params=pltpu.CompilerParams(
                dimension_semantics=("parallel",),
                vmem_limit_bytes=32 * 1024 * 1024),
        )(p2, l2)
        dist = slab[:, 1:width:3]               # joint j's distance lives at lane 3j+1
        return (weight * dist).astype(out_dtype)

    kernel = functools.partial(
        _mpjpe_sum_kernel, rows=rows, width=width, width_p=width_p, chunk=chunk,
        inner=inner, batch=batch, mask_rows=mask_rows)
    partials = pl.pallas_call(
        kernel,
        out_shape=jax.ShapeDtypeStruct((outer * 8, width_p), jnp.float32),
        grid=(outer, inner),
        in_specs=[pl.BlockSpec((rows, width), lambda o, i: (o * inner + i, 0)),
                  pl.BlockSpec((rows, width), lambda o, i: (o * inner + i, 0))],
        out_specs=pl.BlockSpec((8, width_p), lambda o, i: (o, 0)),
        scratch_shapes=[scratch],
        compiler_params=pltpu.CompilerParams(
            dimension_semantics=("parallel", "arbitrary"),
            vmem_limit_bytes=32 * 1024 * 1024),
    )(p2, l2)
    total = jnp.sum(partials)                   # tiny final cross-lane reduce
    if reduction == "sum":
        out = weight * total
    else:                                       # 'elementwise_mean' (default)
        out = weight * (total / n_joints)
    return out.astype(out_dtype)


# ----------------------------------- test -------------------------------------


if __name__ == "__main__":
    key = jax.random.PRNGKey(0)

    def check(batch, joints, tag,
              reductions=("elementwise_mean", "sum", "none"), **kw):
        k1, k2 = jax.random.split(jax.random.fold_in(key, batch * 131 + joints))
        pred = jax.random.normal(k1, (batch, joints, 3), dtype=jnp.float32)
        label = jax.random.normal(k2, (batch, joints, 3), dtype=jnp.float32)
        for reduction in reductions:
            out = jax.block_until_ready(
                mpjpe_criterion(pred, label, weight=2.0, reduction=reduction, **kw))
            ref = jax.block_until_ready(_mpjpe_jax(pred, label, 2.0, reduction))
            if not bool(jnp.allclose(out, ref, rtol=1e-4, atol=1e-5)):
                raise AssertionError(f"{tag}/{reduction}: pallas={out} ref={ref}")

    # Tiny problem: stays on the fused-XLA fast path (below the Pallas threshold).
    check(2, 17, "tiny-fallback")
    # Single Pallas block, batch not a multiple of 8 (tail chunk + odd row fold).
    check(100, 17, "pallas-single-block", min_pallas_joints=1)
    # Multi-block grid: 2-way "parallel" outer split, sequential inner
    # accumulation, and a masked partial final row-block.
    check(1000, 17, "pallas-grid", min_pallas_joints=1,
          target_block_bytes=128 * 1024)
    # Default dispatch: clears the Pallas threshold, single big block with a
    # long in-kernel chunk loop.
    check(4096, 17, "pallas-default", reductions=("elementwise_mean", "none"))

    print("KERNEL_OK")
</pallas_src>

<mosaic_0001>
module attributes {stable_mosaic.version = 11 : i64} {
  func.func @_mpjpe_sum_kernel(%arg0: i32, %arg1: i32, %arg2: memref<100x51xf32, #tpu.memory_space<vmem>>, %arg3: memref<100x51xf32, #tpu.memory_space<vmem>>, %arg4: memref<8x128xf32, #tpu.memory_space<vmem>>, %arg5: memref<64x128xf32, #tpu.memory_space<vmem>>) attributes {dimension_semantics = [#tpu.dimension_semantics<parallel>, #tpu.dimension_semantics<arbitrary>], iteration_bounds = array<i64: 1, 1>, scalar_prefetch = 0 : i64, scratch_operands = 1 : i64, tpu.core_type = #tpu.core_type<tc>, window_params = [{transform_indices = @transform_0, window_bounds = array<i64: 100, 51>}, {transform_indices = @transform_1, window_bounds = array<i64: 100, 51>}, {transform_indices = @transform_2, window_bounds = array<i64: 8, 128>}]} {
    %c0_i32 = arith.constant 0 : i32
    %0 = arith.cmpi eq, %arg1, %c0_i32 : i32
    %1 = arith.extui %0 : i1 to i32
    %c0_i32_0 = arith.constant 0 : i32
    %2 = arith.cmpi ne, %1, %c0_i32_0 : i32
    scf.if %2 {
      %cst_32 = arith.constant 0.000000e+00 : f32
      %67 = vector.broadcast %cst_32 : f32 to vector<8x128xf32>
      %c0_33 = arith.constant 0 : index
      %c0_34 = arith.constant 0 : index
      %68 = vector.load %arg4[%c0_33, %c0_34] : memref<8x128xf32, #tpu.memory_space<vmem>>, vector<8x128xf32>
      tpu.vector_store %arg4[%c0_33, %c0_34], %67 {strides = array<i32>} : memref<8x128xf32, #tpu.memory_space<vmem>>, vector<8x128xf32>,
    } else {
    }
    %3 = tpu.iota {dimensions = array<i32: 1>} : vector<1x128xi32>
    %4 = arith.sitofp %3 : vector<1x128xi32> to vector<1x128xf32>
    %cst = arith.constant 1.000000e+00 : f32
    %5 = vector.broadcast %cst : f32 to vector<1x128xf32>
    %6 = arith.subf %4, %5 : vector<1x128xf32>
    %cst_1 = arith.constant 0.333333343 : f32
    %7 = vector.broadcast %cst_1 : f32 to vector<1x128xf32>
    %8 = arith.mulf %6, %7 : vector<1x128xf32>
    %cst_2 = arith.constant 5.000000e-01 : f32
    %9 = vector.broadcast %cst_2 : f32 to vector<1x128xf32>
    %10 = arith.addf %8, %9 : vector<1x128xf32>
    %11 = math.floor %10 : vector<1x128xf32>
    %cst_3 = arith.constant 3.000000e+00 : f32
    %12 = vector.broadcast %cst_3 : f32 to vector<1x128xf32>
    %13 = arith.mulf %11, %12 : vector<1x128xf32>
    %cst_4 = arith.constant 1.000000e+00 : f32
    %14 = vector.broadcast %cst_4 : f32 to vector<1x128xf32>
    %15 = arith.addf %13, %14 : vector<1x128xf32>
    %16 = arith.cmpf oeq, %15, %4 : vector<1x128xf32>
    %c51_i32 = arith.constant 51 : i32
    %17 = vector.broadcast %c51_i32 : i32 to vector<1x128xi32>
    %18 = arith.cmpi slt, %3, %17 : vector<1x128xi32>
    %19 = arith.andi %16, %18 : vector<1x128xi1>
    %cst_5 = arith.constant 0.000000e+00 : f32
    %20 = vector.broadcast %cst_5 : f32 to vector<8x128xf32>
    %c0 = arith.constant 0 : index
    %c0_6 = arith.constant 0 : index
    %21 = vector.load %arg2[%c0, %c0_6] : memref<100x51xf32, #tpu.memory_space<vmem>>, vector<64x51xf32>
    %c0_7 = arith.constant 0 : index
    %c0_8 = arith.constant 0 : index
    %22 = vector.load %arg3[%c0_7, %c0_8] : memref<100x51xf32, #tpu.memory_space<vmem>>, vector<64x51xf32>
    %23 = arith.subf %21, %22 : vector<64x51xf32>
    %24 = arith.mulf %23, %23 : vector<64x51xf32>
    %c0_9 = arith.constant 0 : index
    %c0_10 = arith.constant 0 : index
    %25 = vector.load %arg5[%c0_9, %c0_10] : memref<64x128xf32, #tpu.memory_space<vmem>>, vector<64x51xf32>
    tpu.vector_store %arg5[%c0_9, %c0_10], %24 {strides = array<i32>} : memref<64x128xf32, #tpu.memory_space<vmem>>, vector<64x51xf32>,
    %c0_11 = arith.constant 0 : index
    %c0_12 = arith.constant 0 : index
    %26 = vector.load %arg5[%c0_11, %c0_12] : memref<64x128xf32, #tpu.memory_space<vmem>>, vector<64x128xf32>
    %c1_i32 = arith.constant 1 : i32
    %27 = tpu.dynamic_rotate %26 by %c1_i32 dim 1 : vector<64x128xf32>, i32 -> vector<64x128xf32>
    %28 = arith.addf %26, %27 : vector<64x128xf32>
    %c127_i32 = arith.constant 127 : i32
    %29 = tpu.dynamic_rotate %26 by %c127_i32 dim 1 : vector<64x128xf32>, i32 -> vector<64x128xf32>
    %30 = arith.addf %28, %29 : vector<64x128xf32>
    %cst_13 = arith.constant 0.000000e+00 : f32
    %31 = vector.shape_cast %19 : vector<1x128xi1> to vector<1x128xi1>
    %32 = vector.broadcast %31 : vector<1x128xi1> to vector<64x128xi1>
    %33 = vector.broadcast %cst_13 : f32 to vector<64x128xf32>
    %34 = arith.select %32, %30, %33 : vector<64x128xi1>, vector<64x128xf32>
    %35 = math.sqrt %34 : vector<64x128xf32>
    %36 = vector.shape_cast %35 : vector<64x128xf32> to vector<8x8x128xf32>
    %cst_14 = arith.constant dense<0.000000e+00> : vector<8x128xf32>
    %37 = vector.multi_reduction <add>, %36, %cst_14 [0] : vector<8x8x128xf32> to vector<8x128xf32>
    %38 = arith.addf %20, %37 : vector<8x128xf32>
    %c64 = arith.constant 64 : index
    %c0_15 = arith.constant 0 : index
    %39 = vector.load %arg2[%c64, %c0_15] : memref<100x51xf32, #tpu.memory_space<vmem>>, vector<36x51xf32>
    %c64_16 = arith.constant 64 : index
    %c0_17 = arith.constant 0 : index
    %40 = vector.load %arg3[%c64_16, %c0_17] : memref<100x51xf32, #tpu.memory_space<vmem>>, vector<36x51xf32>
    %41 = arith.subf %39, %40 : vector<36x51xf32>
    %42 = arith.mulf %41, %41 : vector<36x51xf32>
    %c0_18 = arith.constant 0 : index
    %c0_19 = arith.constant 0 : index
    %43 = vector.load %arg5[%c0_18, %c0_19] : memref<64x128xf32, #tpu.memory_space<vmem>>, vector<36x51xf32>
    tpu.vector_store %arg5[%c0_18, %c0_19], %42 {strides = array<i32>} : memref<64x128xf32, #tpu.memory_space<vmem>>, vector<36x51xf32>,
    %c0_20 = arith.constant 0 : index
    %c0_21 = arith.constant 0 : index
    %44 = vector.load %arg5[%c0_20, %c0_21] : memref<64x128xf32, #tpu.memory_space<vmem>>, vector<36x128xf32>
    %c1_i32_22 = arith.constant 1 : i32
    %45 = tpu.dynamic_rotate %44 by %c1_i32_22 dim 1 : vector<36x128xf32>, i32 -> vector<36x128xf32>
    %46 = arith.addf %44, %45 : vector<36x128xf32>
    %c127_i32_23 = arith.constant 127 : i32
    %47 = tpu.dynamic_rotate %44 by %c127_i32_23 dim 1 : vector<36x128xf32>, i32 -> vector<36x128xf32>
    %48 = arith.addf %46, %47 : vector<36x128xf32>
    %cst_24 = arith.constant 0.000000e+00 : f32
    %49 = vector.shape_cast %19 : vector<1x128xi1> to vector<1x128xi1>
    %50 = vector.broadcast %49 : vector<1x128xi1> to vector<36x128xi1>
    %51 = vector.broadcast %cst_24 : f32 to vector<36x128xf32>
    %52 = arith.select %50, %48, %51 : vector<36x128xi1>, vector<36x128xf32>
    %53 = math.sqrt %52 : vector<36x128xf32>
    %cst_25 = arith.constant dense<0.000000e+00> : vector<128xf32>
    %54 = vector.multi_reduction <add>, %53, %cst_25 [0] : vector<36x128xf32> to vector<128xf32>
    %55 = vector.shape_cast %54 : vector<128xf32> to vector<1x128xf32>
    %56 = tpu.iota {dimensions = array<i32: 0>} : vector<8x128xi32>
    %c0_i32_26 = arith.constant 0 : i32
    %57 = vector.broadcast %c0_i32_26 : i32 to vector<8x128xi32>
    %58 = arith.cmpi eq, %56, %57 : vector<8x128xi32>
    %cst_27 = arith.constant 0.000000e+00 : f32
    %59 = vector.shape_cast %55 : vector<1x128xf32> to vector<1x128xf32>
    %60 = vector.broadcast %59 : vector<1x128xf32> to vector<8x128xf32>
    %61 = vector.broadcast %cst_27 : f32 to vector<8x128xf32>
    %62 = arith.select %58, %60, %61 : vector<8x128xi1>, vector<8x128xf32>
    %63 = arith.addf %38, %62 : vector<8x128xf32>
    %c0_28 = arith.constant 0 : index
    %c0_29 = arith.constant 0 : index
    %64 = vector.load %arg4[%c0_28, %c0_29] : memref<8x128xf32, #tpu.memory_space<vmem>>, vector<8x128xf32>
    %65 = arith.addf %64, %63 : vector<8x128xf32>
    %c0_30 = arith.constant 0 : index
    %c0_31 = arith.constant 0 : index
    %66 = vector.load %arg4[%c0_30, %c0_31] : memref<8x128xf32, #tpu.memory_space<vmem>>, vector<8x128xf32>
    tpu.vector_store %arg4[%c0_30, %c0_31], %65 {strides = array<i32>} : memref<8x128xf32, #tpu.memory_space<vmem>>, vector<8x128xf32>,
    return
  }
  func.func @transform_0(%arg0: i32, %arg1: i32) -> (i32, i32) {
    %c1_i32 = arith.constant 1 : i32
    %0 = arith.muli %arg0, %c1_i32 : i32
    %1 = arith.addi %0, %arg1 : i32
    %c0_i32 = arith.constant 0 : i32
    %c0_i32_0 = arith.constant 0 : i32
    return %1, %c0_i32 : i32, i32
  }
  func.func @transform_1(%arg0: i32, %arg1: i32) -> (i32, i32) {
    %c1_i32 = arith.constant 1 : i32
    %0 = arith.muli %arg0, %c1_i32 : i32
    %1 = arith.addi %0, %arg1 : i32
    %c0_i32 = arith.constant 0 : i32
    %c0_i32_0 = arith.constant 0 : i32
    return %1, %c0_i32 : i32, i32
  }
  func.func @transform_2(%arg0: i32, %arg1: i32) -> (i32, i32) {
    %c0_i32 = arith.constant 0 : i32
    %c0_i32_0 = arith.constant 0 : i32
    return %arg0, %c0_i32 : i32, i32
  }
}

</mosaic_0001>

<llo_original>
// kernel: tpu_custom_call.1
$region0: #{tpu_custom_call.1}
  #allocation0 [shape = 'u32[]', space=smem, size = 0x4, offset = 0x4, fixed_abs, tag = 'smem constant byte address 0x4 - core index']
  #allocation1 [shape = 'u32[72,128]{1,0:T(1,128)}', space=vmem, size = 0x9000, scoped, tag = 'internal scratch']
  #allocation2 [shape = 'f32[64,128]{1,0:T(8,128)}', space=vmem, size = 0x8000, scoped, tag = 'scratch operand']
  %s0 = inlined_call_operand.vmem [shape: f32[100,51], index: 0, kind: input, shape index: {}]
  %s1 = inlined_call_operand.vmem [shape: f32[100,51], index: 1, kind: input, shape index: {}]
  %s2 = inlined_call_operand.hbm [shape: f32[8,128], index: 2, kind: output, shape index: {}]
  %s3 = sld [smem:[#allocation0]]
  $region22: #{tpu_custom_call.1} parent=0
    _
  %s5 = ssub.s32 1, %s3
  %s6 = scalar_select 0, %s5, %s3
  $region1: #{tpu_custom_call.1} parent=0
    #allocation3 [shape = 'u8[4096]{0}', space=vmem, size = 0x1000, scoped, tag = 'output window, operand 0, single buffered']
    #allocation4 [shape = 's32[1]{0}', space=sflag, size = 0x4, scoped, tag = 'scoped memory for tpu_custom_call.1']
    %7 = vsyncpa [#allocation4], 0
    // Predicated region
    $region2: #{tpu_custom_call.1} parent=1 // pred_check
      _
    $region3: #{tpu_custom_call.1} parent=1 // pred_check_branch
      %9 = sbr.rel (0) target = $region5
    $region4: #{tpu_custom_call.1} parent=1 // pred_region
      %s10 = sadd.s32 0, 0
      %s11 = smul.u32 13, %s10
      %p12 = scmp.lt.s32.totalorder %s11, 12
      %s13 = scalar_select %p12, %s11, 12
      %s14 = smul.addr %s13, 8
      %s15 = scalar_lea.vmem %s0, %s14
      %s16 = sadd.s32 0, 0
      %s17 = smul.u32 13, %s16
    $region5: #{tpu_custom_call.1} parent=1 // pred_fallthru
      _
    // Predicated region
    $region6: #{tpu_custom_call.1} parent=1 // pred_check
      _
    $region7: #{tpu_custom_call.1} parent=1 // pred_check_branch
      %19 = sbr.rel (0) target = $region9
    $region8: #{tpu_custom_call.1} parent=1 // pred_region
      %s20 = sadd.s32 0, 0
      %s21 = smul.u32 13, %s20
      %p22 = scmp.lt.s32.totalorder %s21, 12
      %s23 = scalar_select %p22, %s21, 12
      %s24 = smul.addr %s23, 8
      %s25 = scalar_lea.vmem %s1, %s24
      %s26 = sadd.s32 0, 0
      %s27 = smul.u32 13, %s26
    $region9: #{tpu_custom_call.1} parent=1 // pred_fallthru
      _
    %s28 = sadd.s32 0, 0
    %s29 = smul.u32 13, %s28
    %p30 = scmp.lt.s32.totalorder %s29, 12
    %s31 = scalar_select %p30, %s29, 12
    %s32 = smul.addr %s31, 8
    %s33 = scalar_lea.vmem %s0, %s32
    %s34 = sadd.s32 0, 0
    %s35 = smul.u32 13, %s34
    %p36 = scmp.lt.s32.totalorder %s35, 12
    %s37 = scalar_select %p36, %s35, 12
    %s38 = smul.addr %s37, 8
    %s39 = scalar_lea.vmem %s1, %s38
    %s40 = sadd.s32 0, 0
    %s41 = smul.u32 13, %s40
    %p42 = scmp.lt.s32.totalorder %s41, 12
    %s43 = scalar_select %p42, %s41, 12
    %s44 = smul.addr %s43, 8
    %s45 = scalar_lea.vmem %s0, %s44
    %s46 = sadd.s32 0, 0
    %s47 = smul.u32 13, %s46
    %s48 = sadd.s32 0, 0
    %s49 = smul.u32 13, %s48
    %p50 = scmp.lt.s32.totalorder %s49, 12
    %s51 = scalar_select %p50, %s49, 12
    %s52 = smul.addr %s51, 8
    %s53 = scalar_lea.vmem %s1, %s52
    %s54 = sadd.s32 0, 0
    %s55 = smul.u32 13, %s54
    %p56 = scmp.eq.s32.totalorder 0, 0
    // Predicated region
    $region10: #{tpu_custom_call.1} parent=1 // pred_check
      %p57 = pneg %p56
    $region11: #{tpu_custom_call.1} parent=1 // pred_check_branch
      %59 = sbr.rel (%p57) target = $region13
    $region12: #{tpu_custom_call.1} parent=1 // pred_region
      %60 = vst [vmem:[#allocation3] sm:$0xff] 0.0
    $region13: #{tpu_custom_call.1} parent=1 // pred_fallthru
      _
    %v61 = vlaneseq
    %v62 = vand.u32 %v61, 127
    %v63 = vcvt.s32.f32 %v62
    %v64 = vsub.f32 %v63, 1.0
    %v65 = vmul.f32 %v64, 0.33333334
    %v66 = vadd.f32 %v65, 0.5
    %v67 = vfloor.f32 %v66
    %v68 = vmul.f32 %v67, 3.0
    %v69 = vadd.f32 %v68, 1.0
    %vm70 = vcmp.eq.f32.partialorder %v69, %v63
    %vm71 = vcmp.lt.s32.totalorder %v62, 51
    %vm72 = vmand %vm70, %vm71
    %v73 = vld [vmem:[%s45] sm:$0xff]
    %v74 = vld [vmem:[%s45 + $0x8] sm:$0xff]
    %v75 = vld [vmem:[%s45 + $0x10] sm:$0xff]
    %v76 = vld [vmem:[%s45 + $0x18] sm:$0xff]
    %v77 = vld [vmem:[%s45 + $0x20] sm:$0xff]
    %v78 = vld [vmem:[%s45 + $0x28] sm:$0xff]
    %v79 = vld [vmem:[%s45 + $0x30] sm:$0xff]
    %v80 = vld [vmem:[%s45 + $0x38] sm:$0xff]
    %v81 = vld [vmem:[%s53] sm:$0xff]
    %v82 = vld [vmem:[%s53 + $0x8] sm:$0xff]
    %v83 = vld [vmem:[%s53 + $0x10] sm:$0xff]
    %v84 = vld [vmem:[%s53 + $0x18] sm:$0xff]
    %v85 = vld [vmem:[%s53 + $0x20] sm:$0xff]
    %v86 = vld [vmem:[%s53 + $0x28] sm:$0xff]
    %v87 = vld [vmem:[%s53 + $0x30] sm:$0xff]
    %v88 = vld [vmem:[%s53 + $0x38] sm:$0xff]
    %v89 = vsub.f32 %v73, %v81
    %v90 = vsub.f32 %v74, %v82
    %v91 = vsub.f32 %v75, %v83
    %v92 = vsub.f32 %v76, %v84
    %v93 = vsub.f32 %v77, %v85
    %v94 = vsub.f32 %v78, %v86
    %v95 = vsub.f32 %v79, %v87
    %v96 = vsub.f32 %v80, %v88
    %v97 = vmul.f32 %v89, %v89
    %v98 = vmul.f32 %v90, %v90
    %v99 = vmul.f32 %v91, %v91
    %v100 = vmul.f32 %v92, %v92
    %v101 = vmul.f32 %v93, %v93
    %v102 = vmul.f32 %v94, %v94
    %v103 = vmul.f32 %v95, %v95
    %v104 = vmul.f32 %v96, %v96
    %vm105 = vcmask 416768
    %106 = vst.msk [vmem:[#allocation2] sm:$0xff] %vm105, %v97
    %107 = vst.msk [vmem:[#allocation2 + $0x8] sm:$0xff] %vm105, %v98
    %108 = vst.msk [vmem:[#allocation2 + $0x10] sm:$0xff] %vm105, %v99
    %109 = vst.msk [vmem:[#allocation2 + $0x18] sm:$0xff] %vm105, %v100
    %110 = vst.msk [vmem:[#allocation2 + $0x20] sm:$0xff] %vm105, %v101
    %111 = vst.msk [vmem:[#allocation2 + $0x28] sm:$0xff] %vm105, %v102
    %112 = vst.msk [vmem:[#allocation2 + $0x30] sm:$0xff] %vm105, %v103
    %113 = vst.msk [vmem:[#allocation2 + $0x38] sm:$0xff] %vm105, %v104
    %v114 = vld [vmem:[#allocation2] sm:$0xff]
    %v115 = vld [vmem:[#allocation2 + $0x8] sm:$0xff]
    %v116 = vld [vmem:[#allocation2 + $0x10] sm:$0xff]
    %v117 = vld [vmem:[#allocation2 + $0x18] sm:$0xff]
    %v118 = vld [vmem:[#allocation2 + $0x20] sm:$0xff]
    %v119 = vld [vmem:[#allocation2 + $0x28] sm:$0xff]
    %v120 = vld [vmem:[#allocation2 + $0x30] sm:$0xff]
    %v121 = vld [vmem:[#allocation2 + $0x38] sm:$0xff]
    %122 = vrot.lane.b32.xlu0 %v114, 1
    %v123 = vpop.permute.xlu0 %122
    %124 = vrot.lane.b32.xlu0 %v115, 1
    %v125 = vpop.permute.xlu0 %124
    %126 = vrot.lane.b32.xlu0 %v116, 1
    %v127 = vpop.permute.xlu0 %126
    %128 = vrot.lane.b32.xlu0 %v117, 1
    %v129 = vpop.permute.xlu0 %128
    %130 = vrot.lane.b32.xlu0 %v118, 1
    %v131 = vpop.permute.xlu0 %130
    %132 = vrot.lane.b32.xlu0 %v119, 1
    %v133 = vpop.permute.xlu0 %132
    %134 = vrot.lane.b32.xlu0 %v120, 1
    %v135 = vpop.permute.xlu0 %134
    %136 = vrot.lane.b32.xlu0 %v121, 1
    %v137 = vpop.permute.xlu0 %136
    %v138 = vadd.f32 %v114, %v123
    %v139 = vadd.f32 %v115, %v125
    %v140 = vadd.f32 %v116, %v127
    %v141 = vadd.f32 %v117, %v129
    %v142 = vadd.f32 %v118, %v131
    %v143 = vadd.f32 %v119, %v133
    %v144 = vadd.f32 %v120, %v135
    %v145 = vadd.f32 %v121, %v137
    %146 = vrot.lane.b32.xlu0 %v114, 127
    %v147 = vpop.permute.xlu0 %146
    %148 = vrot.lane.b32.xlu0 %v115, 127
    %v149 = vpop.permute.xlu0 %148
    %150 = vrot.lane.b32.xlu0 %v116, 127
    %v151 = vpop.permute.xlu0 %150
    %152 = vrot.lane.b32.xlu0 %v117, 127
    %v153 = vpop.permute.xlu0 %152
    %154 = vrot.lane.b32.xlu0 %v118, 127
    %v155 = vpop.permute.xlu0 %154
    %156 = vrot.lane.b32.xlu0 %v119, 127
    %v157 = vpop.permute.xlu0 %156
    %158 = vrot.lane.b32.xlu0 %v120, 127
    %v159 = vpop.permute.xlu0 %158
    %160 = vrot.lane.b32.xlu0 %v121, 127
    %v161 = vpop.permute.xlu0 %160
    %v162 = vadd.f32 %v138, %v147
    %v163 = vadd.f32 %v139, %v149
    %v164 = vadd.f32 %v140, %v151
    %v165 = vadd.f32 %v141, %v153
    %v166 = vadd.f32 %v142, %v155
    %v167 = vadd.f32 %v143, %v157
    %v168 = vadd.f32 %v144, %v159
    %v169 = vadd.f32 %v145, %v161
    %v170 = vsel %vm72, 1, 0
    %vm171 = vcmp.eq.s32.totalorder %v170, 1
    %v172 = vsel %vm171, %v162, 0.0
    %v173 = vsel %vm171, %v163, 0.0
    %v174 = vsel %vm171, %v164, 0.0
    %v175 = vsel %vm171, %v165, 0.0
    %v176 = vsel %vm171, %v166, 0.0
    %v177 = vsel %vm171, %v167, 0.0
    %v178 = vsel %vm171, %v168, 0.0
    %v179 = vsel %vm171, %v169, 0.0
    %v180 = vrsqrt.pop %v172
    %v181 = vmul.f32 %v180, %v172
    %v182 = vmul.f32 %v181, %v180
    %v183 = vmul.f32 0.5, %v182
    %v184 = vsub.f32 1.5, %v183
    %v185 = vmul.f32 %v180, %v184
    %v186 = vmul.f32 %v172, %v185
    %vm187 = vcmp.eq.f32.partialorder %v172, inf
    %v188 = vsel %vm187, %v172, %v186
    %vm189 = vcmp.eq.f32.partialorder %v172, 0.0
    %v190 = vand.u32 %v172, 2147483648
    %v191 = vsel %vm189, %v190, %v188
    %v192 = vrsqrt.pop %v173
    %v193 = vmul.f32 %v192, %v173
    %v194 = vmul.f32 %v193, %v192
    %v195 = vmul.f32 0.5, %v194
    %v196 = vsub.f32 1.5, %v195
    %v197 = vmul.f32 %v192, %v196
    %v198 = vmul.f32 %v173, %v197
    %vm199 = vcmp.eq.f32.partialorder %v173, inf
    %v200 = vsel %vm199, %v173, %v198
    %vm201 = vcmp.eq.f32.partialorder %v173, 0.0
    %v202 = vand.u32 %v173, 2147483648
    %v203 = vsel %vm201, %v202, %v200
    %v204 = vrsqrt.pop %v174
    %v205 = vmul.f32 %v204, %v174
    %v206 = vmul.f32 %v205, %v204
    %v207 = vmul.f32 0.5, %v206
    %v208 = vsub.f32 1.5, %v207
    %v209 = vmul.f32 %v204, %v208
    %v210 = vmul.f32 %v174, %v209
    %vm211 = vcmp.eq.f32.partialorder %v174, inf
    %v212 = vsel %vm211, %v174, %v210
    %vm213 = vcmp.eq.f32.partialorder %v174, 0.0
    %v214 = vand.u32 %v174, 2147483648
    %v215 = vsel %vm213, %v214, %v212
    %v216 = vrsqrt.pop %v175
    %v217 = vmul.f32 %v216, %v175
    %v218 = vmul.f32 %v217, %v216
    %v219 = vmul.f32 0.5, %v218
    %v220 = vsub.f32 1.5, %v219
    %v221 = vmul.f32 %v216, %v220
    %v222 = vmul.f32 %v175, %v221
    %vm223 = vcmp.eq.f32.partialorder %v175, inf
    %v224 = vsel %vm223, %v175, %v222
    %vm225 = vcmp.eq.f32.partialorder %v175, 0.0
    %v226 = vand.u32 %v175, 2147483648
    %v227 = vsel %vm225, %v226, %v224
    %v228 = vrsqrt.pop %v176
    %v229 = vmul.f32 %v228, %v176
    %v230 = vmul.f32 %v229, %v228
    %v231 = vmul.f32 0.5, %v230
    %v232 = vsub.f32 1.5, %v231
    %v233 = vmul.f32 %v228, %v232
    %v234 = vmul.f32 %v176, %v233
    %vm235 = vcmp.eq.f32.partialorder %v176, inf
    %v236 = vsel %vm235, %v176, %v234
    %vm237 = vcmp.eq.f32.partialorder %v176, 0.0
    %v238 = vand.u32 %v176, 2147483648
    %v239 = vsel %vm237, %v238, %v236
    %v240 = vrsqrt.pop %v177
    %v241 = vmul.f32 %v240, %v177
    %v242 = vmul.f32 %v241, %v240
    %v243 = vmul.f32 0.5, %v242
    %v244 = vsub.f32 1.5, %v243
    %v245 = vmul.f32 %v240, %v244
    %v246 = vmul.f32 %v177, %v245
    %vm247 = vcmp.eq.f32.partialorder %v177, inf
    %v248 = vsel %vm247, %v177, %v246
    %vm249 = vcmp.eq.f32.partialorder %v177, 0.0
    %v250 = vand.u32 %v177, 2147483648
    %v251 = vsel %vm249, %v250, %v248
    %v252 = vrsqrt.pop %v178
    %v253 = vmul.f32 %v252, %v178
    %v254 = vmul.f32 %v253, %v252
    %v255 = vmul.f32 0.5, %v254
    %v256 = vsub.f32 1.5, %v255
    %v257 = vmul.f32 %v252, %v256
    %v258 = vmul.f32 %v178, %v257
    %vm259 = vcmp.eq.f32.partialorder %v178, inf
    %v260 = vsel %vm259, %v178, %v258
    %vm261 = vcmp.eq.f32.partialorder %v178, 0.0
    %v262 = vand.u32 %v178, 2147483648
    %v263 = vsel %vm261, %v262, %v260
    %v264 = vrsqrt.pop %v179
    %v265 = vmul.f32 %v264, %v179
    %v266 = vmul.f32 %v265, %v264
    %v267 = vmul.f32 0.5, %v266
    %v268 = vsub.f32 1.5, %v267
    %v269 = vmul.f32 %v264, %v268
    %v270 = vmul.f32 %v179, %v269
    %vm271 = vcmp.eq.f32.partialorder %v179, inf
    %v272 = vsel %vm271, %v179, %v270
    %vm273 = vcmp.eq.f32.partialorder %v179, 0.0
    %v274 = vand.u32 %v179, 2147483648
    %v275 = vsel %vm273, %v274, %v272
    %v276 = vadd.f32 %v191, %v203
    %v277 = vadd.f32 %v276, %v215
    %v278 = vadd.f32 %v277, %v227
    %v279 = vadd.f32 %v278, %v239
    %v280 = vadd.f32 %v279, %v251
    %v281 = vadd.f32 %v280, %v263
    %v282 = vadd.f32 %v281, %v275
    %v283 = vadd.f32 %v282, 0.0
    %v284 = vld [vmem:[%s45 + $0x40] sm:$0xff]
    %v285 = vld [vmem:[%s45 + $0x48] sm:$0xff]
    %v286 = vld [vmem:[%s45 + $0x50] sm:$0xff]
    %v287 = vld [vmem:[%s45 + $0x58] sm:$0xff]
    %v288 = vld [vmem:[%s45 + $0x60] sm:$0xf]
    %v289 = vld [vmem:[%s53 + $0x40] sm:$0xff]
    %v290 = vld [vmem:[%s53 + $0x48] sm:$0xff]
    %v291 = vld [vmem:[%s53 + $0x50] sm:$0xff]
    %v292 = vld [vmem:[%s53 + $0x58] sm:$0xff]
    %v293 = vld [vmem:[%s53 + $0x60] sm:$0xf]
    %v294 = vsub.f32 %v284, %v289
    %v295 = vsub.f32 %v285, %v290
    %v296 = vsub.f32 %v286, %v291
    %v297 = vsub.f32 %v287, %v292
    %v298 = vsub.f32 %v288, %v293
    %v299 = vmul.f32 %v294, %v294
    %v300 = vmul.f32 %v295, %v295
    %v301 = vmul.f32 %v296, %v296
    %v302 = vmul.f32 %v297, %v297
    %v303 = vmul.f32 %v298, %v298
    %304 = vst.msk [vmem:[#allocation2] sm:$0xff] %vm105, %v299
    %305 = vst.msk [vmem:[#allocation2 + $0x8] sm:$0xff] %vm105, %v300
    %306 = vst.msk [vmem:[#allocation2 + $0x10] sm:$0xff] %vm105, %v301
    %307 = vst.msk [vmem:[#allocation2 + $0x18] sm:$0xff] %vm105, %v302
    %vm308 = vcmask 412672
    %309 = vst.msk [vmem:[#allocation2 + $0x20] sm:$0xf] %vm308, %v303
    %v310 = vld [vmem:[#allocation2] sm:$0xff]
    %v311 = vld [vmem:[#allocation2 + $0x8] sm:$0xff]
    %v312 = vld [vmem:[#allocation2 + $0x10] sm:$0xff]
    %v313 = vld [vmem:[#allocation2 + $0x18] sm:$0xff]
    %v314 = vld [vmem:[#allocation2 + $0x20] sm:$0xf]
    %315 = vrot.lane.b32.xlu0 %v310, 1
    %v316 = vpop.permute.xlu0 %315
    %317 = vrot.lane.b32.xlu0 %v311, 1
    %v318 = vpop.permute.xlu0 %317
    %319 = vrot.lane.b32.xlu0 %v312, 1
    %v320 = vpop.permute.xlu0 %319
    %321 = vrot.lane.b32.xlu0 %v313, 1
    %v322 = vpop.permute.xlu0 %321
    %323 = vrot.lane.b32.xlu0 %v314, 1
    %v324 = vpop.permute.xlu0 %323
    %v325 = vadd.f32 %v310, %v316
    %v326 = vadd.f32 %v311, %v318
    %v327 = vadd.f32 %v312, %v320
    %v328 = vadd.f32 %v313, %v322
    %v329 = vadd.f32 %v314, %v324
    %330 = vrot.lane.b32.xlu0 %v310, 127
    %v331 = vpop.permute.xlu0 %330
    %332 = vrot.lane.b32.xlu0 %v311, 127
    %v333 = vpop.permute.xlu0 %332
    %334 = vrot.lane.b32.xlu0 %v312, 127
    %v335 = vpop.permute.xlu0 %334
    %336 = vrot.lane.b32.xlu0 %v313, 127
    %v337 = vpop.permute.xlu0 %336
    %338 = vrot.lane.b32.xlu0 %v314, 127
    %v339 = vpop.permute.xlu0 %338
    %v340 = vadd.f32 %v325, %v331
    %v341 = vadd.f32 %v326, %v333
    %v342 = vadd.f32 %v327, %v335
    %v343 = vadd.f32 %v328, %v337
    %v344 = vadd.f32 %v329, %v339
    %v345 = vsel %vm171, %v340, 0.0
    %v346 = vsel %vm171, %v341, 0.0
    %v347 = vsel %vm171, %v342, 0.0
    %v348 = vsel %vm171, %v343, 0.0
    %v349 = vsel %vm171, %v344, 0.0
    %v350 = vrsqrt.pop %v345
    %v351 = vmul.f32 %v350, %v345
    %v352 = vmul.f32 %v351, %v350
    %v353 = vmul.f32 0.5, %v352
    %v354 = vsub.f32 1.5, %v353
    %v355 = vmul.f32 %v350, %v354
    %v356 = vmul.f32 %v345, %v355
    %vm357 = vcmp.eq.f32.partialorder %v345, inf
    %v358 = vsel %vm357, %v345, %v356
    %vm359 = vcmp.eq.f32.partialorder %v345, 0.0
    %v360 = vand.u32 %v345, 2147483648
    %v361 = vsel %vm359, %v360, %v358
    %v362 = vrsqrt.pop %v346
    %v363 = vmul.f32 %v362, %v346
    %v364 = vmul.f32 %v363, %v362
    %v365 = vmul.f32 0.5, %v364
    %v366 = vsub.f32 1.5, %v365
    %v367 = vmul.f32 %v362, %v366
    %v368 = vmul.f32 %v346, %v367
    %vm369 = vcmp.eq.f32.partialorder %v346, inf
    %v370 = vsel %vm369, %v346, %v368
    %vm371 = vcmp.eq.f32.partialorder %v346, 0.0
    %v372 = vand.u32 %v346, 2147483648
    %v373 = vsel %vm371, %v372, %v370
    %v374 = vrsqrt.pop %v347
    %v375 = vmul.f32 %v374, %v347
    %v376 = vmul.f32 %v375, %v374
    %v377 = vmul.f32 0.5, %v376
    %v378 = vsub.f32 1.5, %v377
    %v379 = vmul.f32 %v374, %v378
    %v380 = vmul.f32 %v347, %v379
    %vm381 = vcmp.eq.f32.partialorder %v347, inf
    %v382 = vsel %vm381, %v347, %v380
    %vm383 = vcmp.eq.f32.partialorder %v347, 0.0
    %v384 = vand.u32 %v347, 2147483648
    %v385 = vsel %vm383, %v384, %v382
    %v386 = vrsqrt.pop %v348
    %v387 = vmul.f32 %v386, %v348
    %v388 = vmul.f32 %v387, %v386
    %v389 = vmul.f32 0.5, %v388
    %v390 = vsub.f32 1.5, %v389
    %v391 = vmul.f32 %v386, %v390
    %v392 = vmul.f32 %v348, %v391
    %vm393 = vcmp.eq.f32.partialorder %v348, inf
    %v394 = vsel %vm393, %v348, %v392
    %vm395 = vcmp.eq.f32.partialorder %v348, 0.0
    %v396 = vand.u32 %v348, 2147483648
    %v397 = vsel %vm395, %v396, %v394
    %v398 = vrsqrt.pop %v349
    %v399 = vmul.f32 %v398, %v349
    %v400 = vmul.f32 %v399, %v398
    %v401 = vmul.f32 0.5, %v400
    %v402 = vsub.f32 1.5, %v401
    %v403 = vmul.f32 %v398, %v402
    %v404 = vmul.f32 %v349, %v403
    %vm405 = vcmp.eq.f32.partialorder %v349, inf
    %v406 = vsel %vm405, %v349, %v404
    %vm407 = vcmp.eq.f32.partialorder %v349, 0.0
    %v408 = vand.u32 %v349, 2147483648
    %v409 = vsel %vm407, %v408, %v406
    %v410 = vadd.f32 %v361, %v373
    %v411 = vadd.f32 %v410, %v385
    %v412 = vadd.f32 %v411, %v397
    %vm413 = vcmask 1043456
    %v414 = vsel %vm413, %v409, 0.0
    %v415 = vadd.f32 %v412, %v414
    %v416 = vrot.slane %v415, 4
    %v417 = vadd.f32 %v415, %v416
    %v418 = vrot.slane %v417, 2
    %v419 = vadd.f32 %v417, %v418
    %v420 = vrot.slane %v419, 1
    %v421 = vadd.f32 %v419, %v420
    %v422 = vlaneseq
    %v423 = vshrl.u32 %v422, 7
    %vm424 = vcmp.eq.s32.totalorder %v423, 0
    %v425 = vsel %vm424, %v421, 0.0
    %v426 = vadd.f32 %v283, %v425
    %v427 = vld [vmem:[#allocation3] sm:$0xff]
    %v428 = vadd.f32 %v427, %v426
    %429 = vst [vmem:[#allocation3] sm:$0xff] %v428
    // Predicated region
    $region14: #{tpu_custom_call.1} parent=1 // pred_check
      _
    $region15: #{tpu_custom_call.1} parent=1 // pred_check_branch
      %431 = sbr.rel (0) target = $region17
    $region16: #{tpu_custom_call.1} parent=1 // pred_region
      %433 = vsyncadd [#allocation4], 0
      %s435 = sshll.u32 [#allocation3], 4
      %s436 = int_to_ptr.vmem [resolvable:$true] %s435
      %s437 = sshll.u32 %s2, 4
      %s438 = int_to_ptr.hbm [resolvable:$true] %s437
      %440 = dma.vmem_to_hbm [thread:$0]  %s436, 128, %s438, [#allocation4]
    $region17: #{tpu_custom_call.1} parent=1 // pred_fallthru
      _
    // Predicated region
    $region18: #{tpu_custom_call.1} parent=1 // pred_check
      _
    $region19: #{tpu_custom_call.1} parent=1 // pred_check_branch
      %442 = sbr.rel (0) target = $region21
    $region20: #{tpu_custom_call.1} parent=1 // pred_region
      %444 = dma.done [#allocation4], 128
    $region21: #{tpu_custom_call.1} parent=1 // pred_fallthru
      _
    %445 = vsyncpa [#allocation4], 1

</llo_original>
